<compile_context>
chip_gen: v7x
topology: tpu7x:2x2x1
jax: 0.10.0
libtpu: 0.0.40
codegen_flags: <defaults>
</compile_context>

<pallas_src>
import math

import jax
import jax.numpy as jnp
from jax import lax
from jax.experimental import pallas as pl
from jax.experimental.pallas import tpu as pltpu
import numpy as np

# ----- module hyper-parameters (small, consistent with the nn.Module) -----
B = 2             # batch
S = 8             # seq_len
DIM = 32          # hidden dim
NUM_HEADS = 4
NUM_KV_HEADS = 2                        # GQA: exercises repeat_kv
HEAD_DIM = DIM // NUM_HEADS             # 8
KV_DIM = NUM_KV_HEADS * HEAD_DIM        # 16
REPEATS = NUM_HEADS // NUM_KV_HEADS     # 2  (== dim // kv_dim in the module)
QKV_OUT = DIM + 2 * KV_DIM              # 64
T = B * S                               # 16 flattened tokens
RT = REPEATS * T                        # 32 GQA-stacked rows


def _causal_mha_kernel(x_ref, wqkv_ref, wo_ref, bias_ref, o_ref):
    """Single-invocation fused forward.

    x_ref:    (T, DIM)        flattened tokens (batch-major)
    wqkv_ref: (DIM, QKV_OUT)  c_attn weight^T, 1/sqrt(head_dim) folded into Q cols
    wo_ref:   (DIM, DIM)      c_proj weight^T
    bias_ref: (RT, T)         additive mask bias (0 on allowed, finfo.min elsewhere)
    o_ref:    (T, DIM)
    """
    x = x_ref[...]                                                        # (T, DIM)

    # One packed projection for all of Q, K, V.
    qkv = jnp.dot(x, wqkv_ref[...], preferred_element_type=jnp.float32)   # (T, QKV_OUT)
    bias = bias_ref[...]                                                  # (RT, T)

    head_out = [None] * NUM_HEADS
    for g in range(NUM_KV_HEADS):                     # static 2-iteration loop
        kg = qkv[:, DIM + g * HEAD_DIM: DIM + (g + 1) * HEAD_DIM]                   # (T, HD)
        vg = qkv[:, DIM + KV_DIM + g * HEAD_DIM: DIM + KV_DIM + (g + 1) * HEAD_DIM] # (T, HD)

        # GQA repeat_kv: sublane-stack the REPEATS query heads sharing this KV head.
        q_stack = jnp.concatenate(
            [qkv[:, (g * REPEATS + r) * HEAD_DIM:(g * REPEATS + r + 1) * HEAD_DIM]
             for r in range(REPEATS)],
            axis=0,
        )                                                                 # (RT, HD)

        # Scores: contract last dims directly (no kg.T materialized).
        s = lax.dot_general(q_stack, kg,
                            dimension_numbers=(((1,), (1,)), ((), ())),
                            preferred_element_type=jnp.float32)           # (RT, T)
        s = s + bias                                                      # causal + batch mask

        # Softmax with normalization deferred past the PV matmul.
        m = jnp.max(s, axis=-1, keepdims=True)
        p = jnp.exp(s - m)                                                # (RT, T) unnormalized
        l = jnp.sum(p, axis=-1, keepdims=True)                            # (RT, 1)
        og = jnp.dot(p, vg, preferred_element_type=jnp.float32)           # (RT, HD)
        og = og * pl.reciprocal(l, approx=False)                          # exact, keeps 1e-5 check

        for r in range(REPEATS):
            head_out[g * REPEATS + r] = og[r * T:(r + 1) * T, :]          # (T, HD)

    # Lane-concatenate head outputs and do ONE output-projection matmul.
    y = jnp.concatenate(head_out, axis=1)                                 # (T, DIM)
    o_ref[...] = jnp.dot(y, wo_ref[...],
                         preferred_element_type=jnp.float32).astype(o_ref.dtype)


@jax.jit
def causal_multihead_attention(x, wqkv_t, wo_t, mask_bias):
    """x: (B, S, DIM); wqkv_t/wo_t/mask_bias from prepare_params()."""
    b, s, d = x.shape
    x2d = x.reshape(b * s, d)                         # lane-aligned (B*S, DIM) slab
    vmem = pl.BlockSpec(memory_space=pltpu.MemorySpace.VMEM)
    out2d = pl.pallas_call(
        _causal_mha_kernel,
        out_shape=jax.ShapeDtypeStruct((b * s, d), x.dtype),
        in_specs=[vmem, vmem, vmem, vmem],
        out_specs=vmem,
        # no grid / no dimension_semantics: single step, single core
    )(x2d, wqkv_t, wo_t, mask_bias)
    return out2d.reshape(b, s, d)


def prepare_params(w_qkv, w_out):
    """One-time host-side parameter / constant transform (not per-call work).

    w_qkv: (QKV_OUT, DIM)  c_attn weight, torch nn.Linear convention [out, in]
    w_out: (DIM, DIM)      c_proj weight, torch nn.Linear convention [out, in]
    """
    scale = np.float32(1.0 / math.sqrt(HEAD_DIM))
    w_qkv_t = np.asarray(w_qkv).T.astype(np.float32).copy()     # (DIM, QKV_OUT): qkv = x @ w_qkv_t
    w_qkv_t[:, :DIM] *= scale                                   # fold attention scale into Q cols
    wo_t = np.asarray(w_out).T.astype(np.float32)               # (DIM, DIM): y @ wo_t

    # Batch-block-diagonal causal mask over flattened tokens, as an additive bias.
    # Rows are the GQA-stacked (head-repeat, token) index: tq = row % T.
    rows = np.arange(RT, dtype=np.int64)[:, None]
    cols = np.arange(T, dtype=np.int64)[None, :]
    tq = rows % T
    allowed = (tq // S == cols // S) & (cols <= tq)
    neg = np.float32(np.finfo(np.float32).min)
    mask_bias = np.where(allowed, np.float32(0.0), neg).astype(np.float32)   # (RT, T)

    return jnp.asarray(w_qkv_t), jnp.asarray(wo_t), jnp.asarray(mask_bias)


def _reference(x, w_qkv, w_out):
    """Plain-JAX reference mirroring the PyTorch forward (is_causal=True, no bias)."""
    qkv = x @ w_qkv.T                               # (B, S, QKV_OUT)
    q, k, v = jnp.split(qkv, [DIM, DIM + KV_DIM], axis=-1)
    q = q.reshape(B, S, NUM_HEADS, HEAD_DIM)
    k = k.reshape(B, S, NUM_KV_HEADS, HEAD_DIM)
    v = v.reshape(B, S, NUM_KV_HEADS, HEAD_DIM)
    k = jnp.repeat(k, REPEATS, axis=2)              # repeat_kv (repeat_interleave)
    v = jnp.repeat(v, REPEATS, axis=2)
    q = q.transpose(0, 2, 1, 3)                     # (B, H, S, HD)
    k = k.transpose(0, 2, 1, 3)
    v = v.transpose(0, 2, 1, 3)
    s = (q @ k.transpose(0, 1, 3, 2)) / math.sqrt(HEAD_DIM)
    causal = jnp.tril(jnp.ones((S, S), dtype=bool))
    s = jnp.where(causal, s, jnp.finfo(jnp.float32).min)
    p = jax.nn.softmax(s.astype(jnp.float32), axis=-1).astype(q.dtype)
    y = (p @ v).transpose(0, 2, 1, 3).reshape(B, S, DIM)
    return y @ w_out.T


if __name__ == "__main__":
    key = jax.random.PRNGKey(0)
    kx, kq, ko = jax.random.split(key, 3)

    x = jax.random.normal(kx, (B, S, DIM), dtype=jnp.float32)
    # Synthetic parameters in torch nn.Linear convention (weight = [out, in]).
    w_qkv = 0.02 * jax.random.normal(kq, (QKV_OUT, DIM), dtype=jnp.float32)
    w_out = 0.02 * jax.random.normal(ko, (DIM, DIM), dtype=jnp.float32)
    # TODO(synk): kv-cache update (start_pos), rotary freqs_cis, custom
    # attn_mask/attn_bias, dropout and return_attn_weight are optional /
    # inference-bookkeeping paths of the module and are not exercised here.

    params = prepare_params(w_qkv, w_out)           # one-time host transform

    y = causal_multihead_attention(x, *params)
    y = jax.block_until_ready(y)

    y_ref = _reference(x, w_qkv, w_out)
    np.testing.assert_allclose(np.asarray(y), np.asarray(y_ref), rtol=1e-5, atol=1e-5)

    print("KERNEL_OK")
</pallas_src>

<mosaic_0001>
module attributes {stable_mosaic.version = 11 : i64} {
  func.func @_causal_mha_kernel(%arg0: memref<16x32xf32, #tpu.memory_space<vmem>>, %arg1: memref<32x64xf32, #tpu.memory_space<vmem>>, %arg2: memref<32x32xf32, #tpu.memory_space<vmem>>, %arg3: memref<32x16xf32, #tpu.memory_space<vmem>>, %arg4: memref<16x32xf32, #tpu.memory_space<vmem>>) attributes {dimension_semantics = [], scalar_prefetch = 0 : i64, scratch_operands = 0 : i64, tpu.core_type = #tpu.core_type<tc>} {
    %c0 = arith.constant 0 : index
    %c0_0 = arith.constant 0 : index
    %0 = vector.load %arg0[%c0, %c0_0] : memref<16x32xf32, #tpu.memory_space<vmem>>, vector<16x32xf32>
    %c0_1 = arith.constant 0 : index
    %c0_2 = arith.constant 0 : index
    %1 = vector.load %arg1[%c0_1, %c0_2] : memref<32x64xf32, #tpu.memory_space<vmem>>, vector<32x64xf32>
    %cst = arith.constant dense<0.000000e+00> : vector<16x64xf32>
    %2 = tpu.matmul %0, %1, %cst {dimension_numbers = #tpu.dot_dimension_numbers<[1], [0], [0], [1], [0, 0, 1, 1], [], []>} : vector<16x32xf32>, vector<32x64xf32>, vector<16x64xf32> -> vector<16x64xf32>
    %c0_3 = arith.constant 0 : index
    %c0_4 = arith.constant 0 : index
    %3 = vector.load %arg3[%c0_3, %c0_4] : memref<32x16xf32, #tpu.memory_space<vmem>>, vector<32x16xf32>
    %4 = vector.extract_strided_slice %2 {offsets = [0, 32], sizes = [16, 8], strides = [1, 1]} : vector<16x64xf32> to vector<16x8xf32>
    %5 = vector.extract_strided_slice %2 {offsets = [0, 48], sizes = [16, 8], strides = [1, 1]} : vector<16x64xf32> to vector<16x8xf32>
    %6 = vector.extract_strided_slice %2 {offsets = [0, 0], sizes = [16, 8], strides = [1, 1]} : vector<16x64xf32> to vector<16x8xf32>
    %7 = vector.extract_strided_slice %2 {offsets = [0, 8], sizes = [16, 8], strides = [1, 1]} : vector<16x64xf32> to vector<16x8xf32>
    %8 = tpu.concatenate %6, %7 in 0 : vector<16x8xf32>, vector<16x8xf32> -> vector<32x8xf32>
    %cst_5 = arith.constant dense<0.000000e+00> : vector<32x16xf32>
    %9 = tpu.matmul %8, %4, %cst_5 {dimension_numbers = #tpu.dot_dimension_numbers<[1], [1], [0], [0], [0, 0, 1, 0], [], []>} : vector<32x8xf32>, vector<16x8xf32>, vector<32x16xf32> -> vector<32x16xf32>
    %10 = arith.addf %9, %3 : vector<32x16xf32>
    %cst_6 = arith.constant dense<0xFF800000> : vector<32xf32>
    %11 = vector.multi_reduction <maximumf>, %10, %cst_6 [1] : vector<32x16xf32> to vector<32xf32>
    %12 = vector.shape_cast %11 : vector<32xf32> to vector<32x1xf32>
    %13 = vector.broadcast %12 : vector<32x1xf32> to vector<32x16xf32>
    %14 = arith.subf %10, %13 : vector<32x16xf32>
    %15 = math.exp %14 : vector<32x16xf32>
    %cst_7 = arith.constant dense<0.000000e+00> : vector<32xf32>
    %16 = vector.multi_reduction <add>, %15, %cst_7 [1] : vector<32x16xf32> to vector<32xf32>
    %17 = vector.shape_cast %16 : vector<32xf32> to vector<32x1xf32>
    %cst_8 = arith.constant dense<0.000000e+00> : vector<32x8xf32>
    %18 = tpu.matmul %15, %5, %cst_8 {dimension_numbers = #tpu.dot_dimension_numbers<[1], [0], [0], [1], [0, 0, 1, 1], [], []>} : vector<32x16xf32>, vector<16x8xf32>, vector<32x8xf32> -> vector<32x8xf32>
    %19 = tpu.reciprocal %17 : vector<32x1xf32> -> vector<32x1xf32>
    %20 = vector.broadcast %19 : vector<32x1xf32> to vector<32x8xf32>
    %21 = arith.mulf %18, %20 : vector<32x8xf32>
    %22 = vector.extract_strided_slice %21 {offsets = [0, 0], sizes = [16, 8], strides = [1, 1]} : vector<32x8xf32> to vector<16x8xf32>
    %23 = vector.extract_strided_slice %21 {offsets = [16, 0], sizes = [16, 8], strides = [1, 1]} : vector<32x8xf32> to vector<16x8xf32>
    %24 = vector.extract_strided_slice %2 {offsets = [0, 40], sizes = [16, 8], strides = [1, 1]} : vector<16x64xf32> to vector<16x8xf32>
    %25 = vector.extract_strided_slice %2 {offsets = [0, 56], sizes = [16, 8], strides = [1, 1]} : vector<16x64xf32> to vector<16x8xf32>
    %26 = vector.extract_strided_slice %2 {offsets = [0, 16], sizes = [16, 8], strides = [1, 1]} : vector<16x64xf32> to vector<16x8xf32>
    %27 = vector.extract_strided_slice %2 {offsets = [0, 24], sizes = [16, 8], strides = [1, 1]} : vector<16x64xf32> to vector<16x8xf32>
    %28 = tpu.concatenate %26, %27 in 0 : vector<16x8xf32>, vector<16x8xf32> -> vector<32x8xf32>
    %cst_9 = arith.constant dense<0.000000e+00> : vector<32x16xf32>
    %29 = tpu.matmul %28, %24, %cst_9 {dimension_numbers = #tpu.dot_dimension_numbers<[1], [1], [0], [0], [0, 0, 1, 0], [], []>} : vector<32x8xf32>, vector<16x8xf32>, vector<32x16xf32> -> vector<32x16xf32>
    %30 = arith.addf %29, %3 : vector<32x16xf32>
    %cst_10 = arith.constant dense<0xFF800000> : vector<32xf32>
    %31 = vector.multi_reduction <maximumf>, %30, %cst_10 [1] : vector<32x16xf32> to vector<32xf32>
    %32 = vector.shape_cast %31 : vector<32xf32> to vector<32x1xf32>
    %33 = vector.broadcast %32 : vector<32x1xf32> to vector<32x16xf32>
    %34 = arith.subf %30, %33 : vector<32x16xf32>
    %35 = math.exp %34 : vector<32x16xf32>
    %cst_11 = arith.constant dense<0.000000e+00> : vector<32xf32>
    %36 = vector.multi_reduction <add>, %35, %cst_11 [1] : vector<32x16xf32> to vector<32xf32>
    %37 = vector.shape_cast %36 : vector<32xf32> to vector<32x1xf32>
    %cst_12 = arith.constant dense<0.000000e+00> : vector<32x8xf32>
    %38 = tpu.matmul %35, %25, %cst_12 {dimension_numbers = #tpu.dot_dimension_numbers<[1], [0], [0], [1], [0, 0, 1, 1], [], []>} : vector<32x16xf32>, vector<16x8xf32>, vector<32x8xf32> -> vector<32x8xf32>
    %39 = tpu.reciprocal %37 : vector<32x1xf32> -> vector<32x1xf32>
    %40 = vector.broadcast %39 : vector<32x1xf32> to vector<32x8xf32>
    %41 = arith.mulf %38, %40 : vector<32x8xf32>
    %42 = vector.extract_strided_slice %41 {offsets = [0, 0], sizes = [16, 8], strides = [1, 1]} : vector<32x8xf32> to vector<16x8xf32>
    %43 = vector.extract_strided_slice %41 {offsets = [16, 0], sizes = [16, 8], strides = [1, 1]} : vector<32x8xf32> to vector<16x8xf32>
    %44 = tpu.concatenate %22, %23, %42, %43 in 1 : vector<16x8xf32>, vector<16x8xf32>, vector<16x8xf32>, vector<16x8xf32> -> vector<16x32xf32>
    %c0_13 = arith.constant 0 : index
    %c0_14 = arith.constant 0 : index
    %45 = vector.load %arg2[%c0_13, %c0_14] : memref<32x32xf32, #tpu.memory_space<vmem>>, vector<32x32xf32>
    %cst_15 = arith.constant dense<0.000000e+00> : vector<16x32xf32>
    %46 = tpu.matmul %44, %45, %cst_15 {dimension_numbers = #tpu.dot_dimension_numbers<[1], [0], [0], [1], [0, 0, 1, 1], [], []>} : vector<16x32xf32>, vector<32x32xf32>, vector<16x32xf32> -> vector<16x32xf32>
    %c0_16 = arith.constant 0 : index
    %c0_17 = arith.constant 0 : index
    %47 = vector.load %arg4[%c0_16, %c0_17] : memref<16x32xf32, #tpu.memory_space<vmem>>, vector<16x32xf32>
    tpu.vector_store %arg4[%c0_16, %c0_17], %46 {strides = array<i32>} : memref<16x32xf32, #tpu.memory_space<vmem>>, vector<16x32xf32>,
    return
  }
}

</mosaic_0001>

<llo_original>
// kernel: causal_multihead_attention.1
$region0: #{causal_multihead_attention.1}
  #allocation0 [shape = 'u32[]', space=smem, size = 0x4, offset = 0x4, fixed_abs, tag = 'smem constant byte address 0x4 - core index']
  #allocation1 [shape = 'u32[144,128]{1,0:T(1,128)}', space=vmem, size = 0x12000, scoped, tag = 'internal scratch']
  %s0 = inlined_call_operand.vmem [shape: f32[16,32], index: 0, kind: input, shape index: {}]
  %s1 = inlined_call_operand.vmem [shape: f32[32,64], index: 1, kind: input, shape index: {}]
  %s2 = inlined_call_operand.hbm [shape: f32[32,32], index: 2, kind: input, shape index: {}]
  %s3 = inlined_call_operand.vmem [shape: f32[32,16], index: 3, kind: input, shape index: {}]
  %s4 = inlined_call_operand.hbm [shape: f32[16,32], index: 4, kind: output, shape index: {}]
  %s5 = sld [smem:[#allocation0]]
  $region30: #{causal_multihead_attention.1} parent=0
    _
  %s7 = ssub.s32 1, %s5
  %s8 = scalar_select 0, %s7, %s5
  $region1: #{causal_multihead_attention.1} parent=0
    #allocation2 [shape = 'u8[16384]{0}', space=vmem, size = 0x4000, scoped, tag = 'input window, operand 2, single buffered']
    #allocation3 [shape = 's32[1]{0}', space=sflag, size = 0x4, scoped, tag = 'scoped memory for causal_multihead_attention.1']
    #allocation4 [shape = 's32[1]{0}', space=sflag, size = 0x4, scoped, tag = 'scoped memory for causal_multihead_attention.1']
    #allocation5 [shape = 'u8[8192]{0}', space=vmem, size = 0x2000, scoped, tag = 'output window, operand 0, single buffered']
    %9 = vsyncpa [#allocation3], 0
    %10 = vsyncpa [#allocation4], 0
    // Predicated region
    $region2: #{causal_multihead_attention.1} parent=1 // pred_check
      _
    $region3: #{causal_multihead_attention.1} parent=1 // pred_check_branch
      %12 = sbr.rel (0) target = $region5
    $region4: #{causal_multihead_attention.1} parent=1 // pred_region
      _
    $region5: #{causal_multihead_attention.1} parent=1 // pred_fallthru
      _
    // Predicated region
    $region6: #{causal_multihead_attention.1} parent=1 // pred_check
      _
    $region7: #{causal_multihead_attention.1} parent=1 // pred_check_branch
      %14 = sbr.rel (0) target = $region9
    $region8: #{causal_multihead_attention.1} parent=1 // pred_region
      _
    $region9: #{causal_multihead_attention.1} parent=1 // pred_fallthru
      _
    // Predicated region
    $region10: #{causal_multihead_attention.1} parent=1 // pred_check
      _
    $region11: #{causal_multihead_attention.1} parent=1 // pred_check_branch
      %16 = sbr.rel (0) target = $region13
    $region12: #{causal_multihead_attention.1} parent=1 // pred_region
      %s18 = ssub.s32 512, 512
      %19 = vsyncadd [#allocation3], %s18
      %s20 = sshll.u32 [#allocation2], 4
      %s21 = int_to_ptr.vmem [resolvable:$true] %s20
      %26 = dma.hbm_to_vmem [thread:$0]  %s2, 512, %s21, [#allocation3], 128, 128, 8
    $region13: #{causal_multihead_attention.1} parent=1 // pred_fallthru
      _
    // Predicated region
    $region14: #{causal_multihead_attention.1} parent=1 // pred_check
      _
    $region15: #{causal_multihead_attention.1} parent=1 // pred_check_branch
      %28 = sbr.rel (0) target = $region17
    $region16: #{causal_multihead_attention.1} parent=1 // pred_region
      _
    $region17: #{causal_multihead_attention.1} parent=1 // pred_fallthru
      _
    // Predicated region
    $region18: #{causal_multihead_attention.1} parent=1 // pred_check
      _
    $region19: #{causal_multihead_attention.1} parent=1 // pred_check_branch
      %30 = sbr.rel (0) target = $region21
    $region20: #{causal_multihead_attention.1} parent=1 // pred_region
      %31 = dma.done [#allocation3], 512
    $region21: #{causal_multihead_attention.1} parent=1 // pred_fallthru
      _
    %v32 = vld [vmem:[%s0] sm:$0xff]
    %v33 = vld [vmem:[%s0 + $0x8] sm:$0xff]
    %v34 = vld [vmem:[%s1] sm:$0xff]
    %v35 = vld [vmem:[%s1 + $0x8] sm:$0xff]
    %v36 = vld [vmem:[%s1 + $0x10] sm:$0xff]
    %v37 = vld [vmem:[%s1 + $0x18] sm:$0xff]
    %vm38 = vcmask 261120
    %v40 = vsel %vm38, %v32, 0
    %v43 = vsel %vm38, %v33, 0
    %45 = vmatprep.subr.mxu0 0.0
    %46 = vmatpush1.msra.mxu0 %v34
    %47 = vmatprep.subr.mxu0 0.0
    %48 = vmatpush1.msra.mxu0 %v35
    %49 = vmatprep.subr.mxu0 0.0
    %50 = vmatpush1.msra.mxu0 %v36
    %51 = vmatprep.subr.mxu0 0.0
    %52 = vmatpush1.msra.mxu0 %v37
    %53 = vmatprep.subr.mxu0 0.0
    %54 = vmatpush1.msra.mxu0 0.0
    %55 = vmatprep.subr.mxu0 0.0
    %56 = vmatpush1.msra.mxu0 0.0
    %57 = vmatprep.subr.mxu0 0.0
    %58 = vmatpush1.msra.mxu0 0.0
    %59 = vmatprep.subr.mxu0 0.0
    %60 = vmatpush1.msra.mxu0 0.0
    %61 = vmatprep.subr.mxu0 0.0
    %62 = vmatpush1.msra.mxu0 0.0
    %63 = vmatprep.subr.mxu0 0.0
    %64 = vmatpush1.msra.mxu0 0.0
    %65 = vmatprep.subr.mxu0 0.0
    %66 = vmatpush1.msra.mxu0 0.0
    %67 = vmatprep.subr.mxu0 0.0
    %68 = vmatpush1.msra.mxu0 0.0
    %69 = vmatprep.subr.mxu0 0.0
    %70 = vmatpush1.msra.mxu0 0.0
    %71 = vmatprep.subr.mxu0 0.0
    %72 = vmatpush1.msra.mxu0 0.0
    %73 = vmatprep.subr.mxu0 0.0
    %74 = vmatpush1.msra.mxu0 0.0
    %75 = vmatprep.subr.mxu0 0.0
    %76 = vmatpush1.msra.mxu0 0.0
    %77 = vmatprep.subr.mxu0 0.0
    %78 = vmatpush1.msra.mxu0 0.0
    %79 = vmatprep.subr.mxu0 0.0
    %80 = vmatpush1.msra.mxu0 0.0
    %81 = vmatprep.subr.mxu0 0.0
    %82 = vmatpush1.msra.mxu0 0.0
    %83 = vmatprep.subr.mxu0 0.0
    %84 = vmatpush1.msra.mxu0 0.0
    %85 = vmatprep.subr.mxu0 0.0
    %86 = vmatpush1.msra.mxu0 0.0
    %87 = vmatprep.subr.mxu0 0.0
    %88 = vmatpush1.msra.mxu0 0.0
    %89 = vmatprep.subr.mxu0 0.0
    %90 = vmatpush1.msra.mxu0 0.0
    %91 = vmatprep.subr.mxu0 0.0
    %92 = vmatpush1.msra.mxu0 0.0
    %93 = vmatprep.subr.mxu0 0.0
    %94 = vmatpush1.msra.mxu0 0.0
    %95 = vmatprep.subr.mxu0 0.0
    %96 = vmatpush1.msra.mxu0 0.0
    %97 = vmatprep.subr.mxu0 0.0
    %98 = vmatpush1.msra.mxu0 0.0
    %99 = vmatprep.subr.mxu0 0.0
    %100 = vmatpush1.msra.mxu0 0.0
    %101 = vmatprep.subr.mxu0 0.0
    %102 = vmatpush1.msra.mxu0 0.0
    %103 = vmatprep.subr.mxu0 0.0
    %104 = vmatpush1.msra.mxu0 0.0
    %105 = vmatprep.subr.mxu0 0.0
    %106 = vmatpush1.msra.mxu0 0.0
    %107 = vmatprep.subr.mxu0 0.0
    %108 = vmatpush1.msra.mxu0 0.0
    %109 = vmatprep.mubr.f32.mxu0 0.0
    %110 = vmatmul.mubr.f32.gmra.mrb[0].mxu0 %v40
    %v111 = vpop.f32.mrb[0].mxu0
    %v112 = vadd.f32 0.0, %v111
    %v113 = vpop.f32.mrb[0].mxu0
    %114 = vmatprep.mubr.f32.mxu0 0.0
    %115 = vmatmul.mubr.f32.gmra.mrb[0].mxu0 %v43
    %v116 = vpop.f32.mrb[0].mxu0
    %v117 = vadd.f32 0.0, %v116
    %v118 = vpop.f32.mrb[0].mxu0
    %119 = vdwg.mxu0
    %v120 = vld [vmem:[%s3] sm:$0xff]
    %v121 = vld [vmem:[%s3 + $0x8] sm:$0xff]
    %v122 = vld [vmem:[%s3 + $0x10] sm:$0xff]
    %v123 = vld [vmem:[%s3 + $0x18] sm:$0xff]
    %126 = vrot.lane.b32.xlu0 %v112, 120
    %v127 = vpop.permute.xlu0 %126
    %128 = vrot.lane.b32.xlu0 %v117, 120
    %v129 = vpop.permute.xlu0 %128
    %130 = vrot.lane.b32.xlu0 %v112, 96
    %v131 = vpop.permute.xlu0 %130
    %132 = vrot.lane.b32.xlu0 %v117, 96
    %v133 = vpop.permute.xlu0 %132
    %vm134 = vcmask 64512
    %v135 = vsel %vm134, %v112, 0
    %v137 = vsel %vm134, %v117, 0
    %v139 = vsel %vm134, %v127, 0
    %v141 = vsel %vm134, %v129, 0
    %v143 = vsel %vm134, %v131, 0
    %v145 = vsel %vm134, %v133, 0
    %147 = vmatprep.subr.mxu0 0.0
    %148 = vmatpush1.xpose.msra.mxu0 %v143
    %149 = vmatprep.subr.mxu0 0.0
    %150 = vmatpush1.xpose.msra.mxu0 %v145
    %151 = vmatprep.subr.mxu0 0.0
    %152 = vmatpush1.xpose.msra.mxu0 0.0
    %153 = vmatprep.subr.mxu0 0.0
    %154 = vmatpush1.xpose.msra.mxu0 0.0
    %155 = vmatprep.subr.mxu0 0.0
    %156 = vmatpush1.xpose.msra.mxu0 0.0
    %157 = vmatprep.subr.mxu0 0.0
    %158 = vmatpush1.xpose.msra.mxu0 0.0
    %159 = vmatprep.subr.mxu0 0.0
    %160 = vmatpush1.xpose.msra.mxu0 0.0
    %161 = vmatprep.subr.mxu0 0.0
    %162 = vmatpush1.xpose.msra.mxu0 0.0
    %163 = vmatprep.subr.mxu0 0.0
    %164 = vmatpush1.xpose.msra.mxu0 0.0
    %165 = vmatprep.subr.mxu0 0.0
    %166 = vmatpush1.xpose.msra.mxu0 0.0
    %167 = vmatprep.subr.mxu0 0.0
    %168 = vmatpush1.xpose.msra.mxu0 0.0
    %169 = vmatprep.subr.mxu0 0.0
    %170 = vmatpush1.xpose.msra.mxu0 0.0
    %171 = vmatprep.subr.mxu0 0.0
    %172 = vmatpush1.xpose.msra.mxu0 0.0
    %173 = vmatprep.subr.mxu0 0.0
    %174 = vmatpush1.xpose.msra.mxu0 0.0
    %175 = vmatprep.subr.mxu0 0.0
    %176 = vmatpush1.xpose.msra.mxu0 0.0
    %177 = vmatprep.subr.mxu0 0.0
    %178 = vmatpush1.xpose.msra.mxu0 0.0
    %179 = vmatprep.subr.mxu0 0.0
    %180 = vmatpush1.xpose.msra.mxu0 0.0
    %181 = vmatprep.subr.mxu0 0.0
    %182 = vmatpush1.xpose.msra.mxu0 0.0
    %183 = vmatprep.subr.mxu0 0.0
    %184 = vmatpush1.xpose.msra.mxu0 0.0
    %185 = vmatprep.subr.mxu0 0.0
    %186 = vmatpush1.xpose.msra.mxu0 0.0
    %187 = vmatprep.subr.mxu0 0.0
    %188 = vmatpush1.xpose.msra.mxu0 0.0
    %189 = vmatprep.subr.mxu0 0.0
    %190 = vmatpush1.xpose.msra.mxu0 0.0
    %191 = vmatprep.subr.mxu0 0.0
    %192 = vmatpush1.xpose.msra.mxu0 0.0
    %193 = vmatprep.subr.mxu0 0.0
    %194 = vmatpush1.xpose.msra.mxu0 0.0
    %195 = vmatprep.subr.mxu0 0.0
    %196 = vmatpush1.xpose.msra.mxu0 0.0
    %197 = vmatprep.subr.mxu0 0.0
    %198 = vmatpush1.xpose.msra.mxu0 0.0
    %199 = vmatprep.subr.mxu0 0.0
    %200 = vmatpush1.xpose.msra.mxu0 0.0
    %201 = vmatprep.subr.mxu0 0.0
    %202 = vmatpush1.xpose.msra.mxu0 0.0
    %203 = vmatprep.subr.mxu0 0.0
    %204 = vmatpush1.xpose.msra.mxu0 0.0
    %205 = vmatprep.subr.mxu0 0.0
    %206 = vmatpush1.xpose.msra.mxu0 0.0
    %207 = vmatprep.subr.mxu0 0.0
    %208 = vmatpush1.xpose.msra.mxu0 0.0
    %209 = vmatprep.subr.mxu0 0.0
    %210 = vmatpush1.xpose.msra.mxu0 0.0
    %211 = vmatprep.mubr.f32.mxu0 0.0
    %212 = vmatmul.mubr.f32.gmra.mrb[0].mxu0 %v135
    %v213 = vpop.f32.mrb[0].mxu0
    %v214 = vadd.f32 %v120, %v213
    %v215 = vpop.f32.mrb[0].mxu0
    %216 = vmatprep.mubr.f32.mxu0 0.0
    %217 = vmatmul.mubr.f32.gmra.mrb[0].mxu0 %v137
    %v218 = vpop.f32.mrb[0].mxu0
    %v219 = vadd.f32 %v121, %v218
    %v220 = vpop.f32.mrb[0].mxu0
    %221 = vmatprep.mubr.f32.mxu0 0.0
    %222 = vmatmul.mubr.f32.gmra.mrb[0].mxu0 %v139
    %v223 = vpop.f32.mrb[0].mxu0
    %v224 = vadd.f32 %v122, %v223
    %v225 = vpop.f32.mrb[0].mxu0
    %226 = vmatprep.mubr.f32.mxu0 0.0
    %227 = vmatmul.mubr.f32.gmra.mrb[0].mxu0 %v141
    %v228 = vpop.f32.mrb[0].mxu0
    %v229 = vadd.f32 %v123, %v228
    %v230 = vpop.f32.mrb[0].mxu0
    %231 = vdwg.mxu0
    %vm232 = vcmask 130048
    %v233 = vsel %vm232, %v214, -inf
    %234 = vmax.xlane.f32.xlu0 %v233
    %v235 = vpop.xlane.xlu0 %234
    %v236 = vsel %vm232, %v219, -inf
    %237 = vmax.xlane.f32.xlu0 %v236
    %v238 = vpop.xlane.xlu0 %237
    %v239 = vsel %vm232, %v224, -inf
    %240 = vmax.xlane.f32.xlu0 %v239
    %v241 = vpop.xlane.xlu0 %240
    %v242 = vsel %vm232, %v229, -inf
    %243 = vmax.xlane.f32.xlu0 %v242
    %v244 = vpop.xlane.xlu0 %243
    %v245 = vsub.f32 %v214, %v235
    %v246 = vsub.f32 %v219, %v238
    %v247 = vsub.f32 %v224, %v241
    %v248 = vsub.f32 %v229, %v244
    %v249 = vmul.f32 %v245, 1.442695
    %v250 = vpow.pop %v249
    %v251 = vmul.f32 %v246, 1.442695
    %v252 = vpow.pop %v251
    %v253 = vmul.f32 %v247, 1.442695
    %v254 = vpow.pop %v253
    %v255 = vmul.f32 %v248, 1.442695
    %v256 = vpow.pop %v255
    %v257 = vsel %vm232, %v250, 0.0
    %258 = vadd.xlane.f32.xlu0 %v257
    %v259 = vpop.xlane.xlu0 %258
    %v260 = vsel %vm232, %v252, 0.0
    %261 = vadd.xlane.f32.xlu0 %v260
    %v262 = vpop.xlane.xlu0 %261
    %v263 = vsel %vm232, %v254, 0.0
    %264 = vadd.xlane.f32.xlu0 %v263
    %v265 = vpop.xlane.xlu0 %264
    %v266 = vsel %vm232, %v256, 0.0
    %267 = vadd.xlane.f32.xlu0 %v266
    %v268 = vpop.xlane.xlu0 %267
    %269 = vrot.lane.b32.xlu0 %v112, 80
    %v270 = vpop.permute.xlu0 %269
    %271 = vrot.lane.b32.xlu0 %v117, 80
    %v272 = vpop.permute.xlu0 %271
    %v276 = vsel %vm232, %v250, 0
    %v279 = vsel %vm232, %v252, 0
    %v282 = vsel %vm232, %v254, 0
    %v285 = vsel %vm232, %v256, 0
    %287 = vmatprep.subr.mxu0 0.0
    %288 = vmatpush1.msra.mxu0 %v270
    %289 = vmatprep.subr.mxu0 0.0
    %290 = vmatpush1.msra.mxu0 %v272
    %291 = vmatprep.subr.mxu0 0.0
    %292 = vmatpush1.msra.mxu0 0.0
    %293 = vmatprep.subr.mxu0 0.0
    %294 = vmatpush1.msra.mxu0 0.0
    %295 = vmatprep.subr.mxu0 0.0
    %296 = vmatpush1.msra.mxu0 0.0
    %297 = vmatprep.subr.mxu0 0.0
    %298 = vmatpush1.msra.mxu0 0.0
    %299 = vmatprep.subr.mxu0 0.0
    %300 = vmatpush1.msra.mxu0 0.0
    %301 = vmatprep.subr.mxu0 0.0
    %302 = vmatpush1.msra.mxu0 0.0
    %303 = vmatprep.subr.mxu0 0.0
    %304 = vmatpush1.msra.mxu0 0.0
    %305 = vmatprep.subr.mxu0 0.0
    %306 = vmatpush1.msra.mxu0 0.0
    %307 = vmatprep.subr.mxu0 0.0
    %308 = vmatpush1.msra.mxu0 0.0
    %309 = vmatprep.subr.mxu0 0.0
    %310 = vmatpush1.msra.mxu0 0.0
    %311 = vmatprep.subr.mxu0 0.0
    %312 = vmatpush1.msra.mxu0 0.0
    %313 = vmatprep.subr.mxu0 0.0
    %314 = vmatpush1.msra.mxu0 0.0
    %315 = vmatprep.subr.mxu0 0.0
    %316 = vmatpush1.msra.mxu0 0.0
    %317 = vmatprep.subr.mxu0 0.0
    %318 = vmatpush1.msra.mxu0 0.0
    %319 = vmatprep.subr.mxu0 0.0
    %320 = vmatpush1.msra.mxu0 0.0
    %321 = vmatprep.subr.mxu0 0.0
    %322 = vmatpush1.msra.mxu0 0.0
    %323 = vmatprep.subr.mxu0 0.0
    %324 = vmatpush1.msra.mxu0 0.0
    %325 = vmatprep.subr.mxu0 0.0
    %326 = vmatpush1.msra.mxu0 0.0
    %327 = vmatprep.subr.mxu0 0.0
    %328 = vmatpush1.msra.mxu0 0.0
    %329 = vmatprep.subr.mxu0 0.0
    %330 = vmatpush1.msra.mxu0 0.0
    %331 = vmatprep.subr.mxu0 0.0
    %332 = vmatpush1.msra.mxu0 0.0
    %333 = vmatprep.subr.mxu0 0.0
    %334 = vmatpush1.msra.mxu0 0.0
    %335 = vmatprep.subr.mxu0 0.0
    %336 = vmatpush1.msra.mxu0 0.0
    %337 = vmatprep.subr.mxu0 0.0
    %338 = vmatpush1.msra.mxu0 0.0
    %339 = vmatprep.subr.mxu0 0.0
    %340 = vmatpush1.msra.mxu0 0.0
    %341 = vmatprep.subr.mxu0 0.0
    %342 = vmatpush1.msra.mxu0 0.0
    %343 = vmatprep.subr.mxu0 0.0
    %344 = vmatpush1.msra.mxu0 0.0
    %345 = vmatprep.subr.mxu0 0.0
    %346 = vmatpush1.msra.mxu0 0.0
    %347 = vmatprep.subr.mxu0 0.0
    %348 = vmatpush1.msra.mxu0 0.0
    %349 = vmatprep.subr.mxu0 0.0
    %350 = vmatpush1.msra.mxu0 0.0
    %351 = vmatprep.mubr.f32.mxu0 0.0
    %352 = vmatmul.mubr.f32.gmra.mrb[0].mxu0 %v276
    %v353 = vpop.f32.mrb[0].mxu0
    %v354 = vadd.f32 0.0, %v353
    %v355 = vpop.f32.mrb[0].mxu0
    %356 = vmatprep.mubr.f32.mxu0 0.0
    %357 = vmatmul.mubr.f32.gmra.mrb[0].mxu0 %v279
    %v358 = vpop.f32.mrb[0].mxu0
    %v359 = vadd.f32 0.0, %v358
    %v360 = vpop.f32.mrb[0].mxu0
    %361 = vmatprep.mubr.f32.mxu0 0.0
    %362 = vmatmul.mubr.f32.gmra.mrb[0].mxu0 %v282
    %v363 = vpop.f32.mrb[0].mxu0
    %v364 = vadd.f32 0.0, %v363
    %v365 = vpop.f32.mrb[0].mxu0
    %366 = vmatprep.mubr.f32.mxu0 0.0
    %367 = vmatmul.mubr.f32.gmra.mrb[0].mxu0 %v285
    %v368 = vpop.f32.mrb[0].mxu0
    %v369 = vadd.f32 0.0, %v368
    %v370 = vpop.f32.mrb[0].mxu0
    %371 = vdwg.mxu0
    %v372 = vrcp.pop %v259
    %v373 = vrcp.pop %v262
    %v374 = vrcp.pop %v265
    %v375 = vrcp.pop %v268
    %v376 = vmul.f32 %v354, %v372
    %v377 = vmul.f32 %v359, %v373
    %v378 = vmul.f32 %v364, %v374
    %v379 = vmul.f32 %v369, %v375
    %380 = vrot.lane.b32.xlu0 %v112, 112
    %v381 = vpop.permute.xlu0 %380
    %382 = vrot.lane.b32.xlu0 %v117, 112
    %v383 = vpop.permute.xlu0 %382
    %384 = vrot.lane.b32.xlu0 %v127, 112
    %v385 = vpop.permute.xlu0 %384
    %386 = vrot.lane.b32.xlu0 %v129, 112
    %v387 = vpop.permute.xlu0 %386
    %388 = vrot.lane.b32.xlu0 %v112, 88
    %v389 = vpop.permute.xlu0 %388
    %390 = vrot.lane.b32.xlu0 %v117, 88
    %v391 = vpop.permute.xlu0 %390
    %v392 = vsel %vm134, %v381, 0
    %v394 = vsel %vm134, %v383, 0
    %v396 = vsel %vm134, %v385, 0
    %v398 = vsel %vm134, %v387, 0
    %v400 = vsel %vm134, %v389, 0
    %v402 = vsel %vm134, %v391, 0
    %404 = vmatprep.subr.mxu0 0.0
    %405 = vmatpush1.xpose.msra.mxu0 %v400
    %406 = vmatprep.subr.mxu0 0.0
    %407 = vmatpush1.xpose.msra.mxu0 %v402
    %408 = vmatprep.subr.mxu0 0.0
    %409 = vmatpush1.xpose.msra.mxu0 0.0
    %410 = vmatprep.subr.mxu0 0.0
    %411 = vmatpush1.xpose.msra.mxu0 0.0
    %412 = vmatprep.subr.mxu0 0.0
    %413 = vmatpush1.xpose.msra.mxu0 0.0
    %414 = vmatprep.subr.mxu0 0.0
    %415 = vmatpush1.xpose.msra.mxu0 0.0
    %416 = vmatprep.subr.mxu0 0.0
    %417 = vmatpush1.xpose.msra.mxu0 0.0
    %418 = vmatprep.subr.mxu0 0.0
    %419 = vmatpush1.xpose.msra.mxu0 0.0
    %420 = vmatprep.subr.mxu0 0.0
    %421 = vmatpush1.xpose.msra.mxu0 0.0
    %422 = vmatprep.subr.mxu0 0.0
    %423 = vmatpush1.xpose.msra.mxu0 0.0
    %424 = vmatprep.subr.mxu0 0.0
    %425 = vmatpush1.xpose.msra.mxu0 0.0
    %426 = vmatprep.subr.mxu0 0.0
    %427 = vmatpush1.xpose.msra.mxu0 0.0
    %428 = vmatprep.subr.mxu0 0.0
    %429 = vmatpush1.xpose.msra.mxu0 0.0
    %430 = vmatprep.subr.mxu0 0.0
    %431 = vmatpush1.xpose.msra.mxu0 0.0
    %432 = vmatprep.subr.mxu0 0.0
    %433 = vmatpush1.xpose.msra.mxu0 0.0
    %434 = vmatprep.subr.mxu0 0.0
    %435 = vmatpush1.xpose.msra.mxu0 0.0
    %436 = vmatprep.subr.mxu0 0.0
    %437 = vmatpush1.xpose.msra.mxu0 0.0
    %438 = vmatprep.subr.mxu0 0.0
    %439 = vmatpush1.xpose.msra.mxu0 0.0
    %440 = vmatprep.subr.mxu0 0.0
    %441 = vmatpush1.xpose.msra.mxu0 0.0
    %442 = vmatprep.subr.mxu0 0.0
    %443 = vmatpush1.xpose.msra.mxu0 0.0
    %444 = vmatprep.subr.mxu0 0.0
    %445 = vmatpush1.xpose.msra.mxu0 0.0
    %446 = vmatprep.subr.mxu0 0.0
    %447 = vmatpush1.xpose.msra.mxu0 0.0
    %448 = vmatprep.subr.mxu0 0.0
    %449 = vmatpush1.xpose.msra.mxu0 0.0
    %450 = vmatprep.subr.mxu0 0.0
    %451 = vmatpush1.xpose.msra.mxu0 0.0
    %452 = vmatprep.subr.mxu0 0.0
    %453 = vmatpush1.xpose.msra.mxu0 0.0
    %454 = vmatprep.subr.mxu0 0.0
    %455 = vmatpush1.xpose.msra.mxu0 0.0
    %456 = vmatprep.subr.mxu0 0.0
    %457 = vmatpush1.xpose.msra.mxu0 0.0
    %458 = vmatprep.subr.mxu0 0.0
    %459 = vmatpush1.xpose.msra.mxu0 0.0
    %460 = vmatprep.subr.mxu0 0.0
    %461 = vmatpush1.xpose.msra.mxu0 0.0
    %462 = vmatprep.subr.mxu0 0.0
    %463 = vmatpush1.xpose.msra.mxu0 0.0
    %464 = vmatprep.subr.mxu0 0.0
    %465 = vmatpush1.xpose.msra.mxu0 0.0
    %466 = vmatprep.subr.mxu0 0.0
    %467 = vmatpush1.xpose.msra.mxu0 0.0
    %468 = vmatprep.mubr.f32.mxu0 0.0
    %469 = vmatmul.mubr.f32.gmra.mrb[0].mxu0 %v392
    %v470 = vpop.f32.mrb[0].mxu0
    %v471 = vadd.f32 %v120, %v470
    %v472 = vpop.f32.mrb[0].mxu0
    %473 = vmatprep.mubr.f32.mxu0 0.0
    %474 = vmatmul.mubr.f32.gmra.mrb[0].mxu0 %v394
    %v475 = vpop.f32.mrb[0].mxu0
    %v476 = vadd.f32 %v121, %v475
    %v477 = vpop.f32.mrb[0].mxu0
    %478 = vmatprep.mubr.f32.mxu0 0.0
    %479 = vmatmul.mubr.f32.gmra.mrb[0].mxu0 %v396
    %v480 = vpop.f32.mrb[0].mxu0
    %v481 = vadd.f32 %v122, %v480
    %v482 = vpop.f32.mrb[0].mxu0
    %483 = vmatprep.mubr.f32.mxu0 0.0
    %484 = vmatmul.mubr.f32.gmra.mrb[0].mxu0 %v398
    %v485 = vpop.f32.mrb[0].mxu0
    %v486 = vadd.f32 %v123, %v485
    %v487 = vpop.f32.mrb[0].mxu0
    %488 = vdwg.mxu0
    %v489 = vsel %vm232, %v471, -inf
    %490 = vmax.xlane.f32.xlu0 %v489
    %v491 = vpop.xlane.xlu0 %490
    %v492 = vsel %vm232, %v476, -inf
    %493 = vmax.xlane.f32.xlu0 %v492
    %v494 = vpop.xlane.xlu0 %493
    %v495 = vsel %vm232, %v481, -inf
    %496 = vmax.xlane.f32.xlu0 %v495
    %v497 = vpop.xlane.xlu0 %496
    %v498 = vsel %vm232, %v486, -inf
    %499 = vmax.xlane.f32.xlu0 %v498
    %v500 = vpop.xlane.xlu0 %499
    %v501 = vsub.f32 %v471, %v491
    %v502 = vsub.f32 %v476, %v494
    %v503 = vsub.f32 %v481, %v497
    %v504 = vsub.f32 %v486, %v500
    %v505 = vmul.f32 %v501, 1.442695
    %v506 = vpow.pop %v505
    %v507 = vmul.f32 %v502, 1.442695
    %v508 = vpow.pop %v507
    %v509 = vmul.f32 %v503, 1.442695
    %v510 = vpow.pop %v509
    %v511 = vmul.f32 %v504, 1.442695
    %v512 = vpow.pop %v511
    %v513 = vsel %vm232, %v506, 0.0
    %514 = vadd.xlane.f32.xlu0 %v513
    %v515 = vpop.xlane.xlu0 %514
    %v516 = vsel %vm232, %v508, 0.0
    %517 = vadd.xlane.f32.xlu0 %v516
    %v518 = vpop.xlane.xlu0 %517
    %v519 = vsel %vm232, %v510, 0.0
    %520 = vadd.xlane.f32.xlu0 %v519
    %v521 = vpop.xlane.xlu0 %520
    %v522 = vsel %vm232, %v512, 0.0
    %523 = vadd.xlane.f32.xlu0 %v522
    %v524 = vpop.xlane.xlu0 %523
    %525 = vrot.lane.b32.xlu0 %v112, 72
    %v526 = vpop.permute.xlu0 %525
    %527 = vrot.lane.b32.xlu0 %v117, 72
    %v528 = vpop.permute.xlu0 %527
    %v532 = vsel %vm232, %v506, 0
    %v535 = vsel %vm232, %v508, 0
    %v538 = vsel %vm232, %v510, 0
    %v541 = vsel %vm232, %v512, 0
    %543 = vmatprep.subr.mxu0 0.0
    %544 = vmatpush1.msra.mxu0 %v526
    %545 = vmatprep.subr.mxu0 0.0
    %546 = vmatpush1.msra.mxu0 %v528
    %547 = vmatprep.subr.mxu0 0.0
    %548 = vmatpush1.msra.mxu0 0.0
    %549 = vmatprep.subr.mxu0 0.0
    %550 = vmatpush1.msra.mxu0 0.0
    %551 = vmatprep.subr.mxu0 0.0
    %552 = vmatpush1.msra.mxu0 0.0
    %553 = vmatprep.subr.mxu0 0.0
    %554 = vmatpush1.msra.mxu0 0.0
    %555 = vmatprep.subr.mxu0 0.0
    %556 = vmatpush1.msra.mxu0 0.0
    %557 = vmatprep.subr.mxu0 0.0
    %558 = vmatpush1.msra.mxu0 0.0
    %559 = vmatprep.subr.mxu0 0.0
    %560 = vmatpush1.msra.mxu0 0.0
    %561 = vmatprep.subr.mxu0 0.0
    %562 = vmatpush1.msra.mxu0 0.0
    %563 = vmatprep.subr.mxu0 0.0
    %564 = vmatpush1.msra.mxu0 0.0
    %565 = vmatprep.subr.mxu0 0.0
    %566 = vmatpush1.msra.mxu0 0.0
    %567 = vmatprep.subr.mxu0 0.0
    %568 = vmatpush1.msra.mxu0 0.0
    %569 = vmatprep.subr.mxu0 0.0
    %570 = vmatpush1.msra.mxu0 0.0
    %571 = vmatprep.subr.mxu0 0.0
    %572 = vmatpush1.msra.mxu0 0.0
    %573 = vmatprep.subr.mxu0 0.0
    %574 = vmatpush1.msra.mxu0 0.0
    %575 = vmatprep.subr.mxu0 0.0
    %576 = vmatpush1.msra.mxu0 0.0
    %577 = vmatprep.subr.mxu0 0.0
    %578 = vmatpush1.msra.mxu0 0.0
    %579 = vmatprep.subr.mxu0 0.0
    %580 = vmatpush1.msra.mxu0 0.0
    %581 = vmatprep.subr.mxu0 0.0
    %582 = vmatpush1.msra.mxu0 0.0
    %583 = vmatprep.subr.mxu0 0.0
    %584 = vmatpush1.msra.mxu0 0.0
    %585 = vmatprep.subr.mxu0 0.0
    %586 = vmatpush1.msra.mxu0 0.0
    %587 = vmatprep.subr.mxu0 0.0
    %588 = vmatpush1.msra.mxu0 0.0
    %589 = vmatprep.subr.mxu0 0.0
    %590 = vmatpush1.msra.mxu0 0.0
    %591 = vmatprep.subr.mxu0 0.0
    %592 = vmatpush1.msra.mxu0 0.0
    %593 = vmatprep.subr.mxu0 0.0
    %594 = vmatpush1.msra.mxu0 0.0
    %595 = vmatprep.subr.mxu0 0.0
    %596 = vmatpush1.msra.mxu0 0.0
    %597 = vmatprep.subr.mxu0 0.0
    %598 = vmatpush1.msra.mxu0 0.0
    %599 = vmatprep.subr.mxu0 0.0
    %600 = vmatpush1.msra.mxu0 0.0
    %601 = vmatprep.subr.mxu0 0.0
    %602 = vmatpush1.msra.mxu0 0.0
    %603 = vmatprep.subr.mxu0 0.0
    %604 = vmatpush1.msra.mxu0 0.0
    %605 = vmatprep.subr.mxu0 0.0
    %606 = vmatpush1.msra.mxu0 0.0
    %607 = vmatprep.mubr.f32.mxu0 0.0
    %608 = vmatmul.mubr.f32.gmra.mrb[0].mxu0 %v532
    %v609 = vpop.f32.mrb[0].mxu0
    %v610 = vadd.f32 0.0, %v609
    %v611 = vpop.f32.mrb[0].mxu0
    %612 = vmatprep.mubr.f32.mxu0 0.0
    %613 = vmatmul.mubr.f32.gmra.mrb[0].mxu0 %v535
    %v614 = vpop.f32.mrb[0].mxu0
    %v615 = vadd.f32 0.0, %v614
    %v616 = vpop.f32.mrb[0].mxu0
    %617 = vmatprep.mubr.f32.mxu0 0.0
    %618 = vmatmul.mubr.f32.gmra.mrb[0].mxu0 %v538
    %v619 = vpop.f32.mrb[0].mxu0
    %v620 = vadd.f32 0.0, %v619
    %v621 = vpop.f32.mrb[0].mxu0
    %622 = vmatprep.mubr.f32.mxu0 0.0
    %623 = vmatmul.mubr.f32.gmra.mrb[0].mxu0 %v541
    %v624 = vpop.f32.mrb[0].mxu0
    %v625 = vadd.f32 0.0, %v624
    %v626 = vpop.f32.mrb[0].mxu0
    %627 = vdwg.mxu0
    %v628 = vrcp.pop %v515
    %v629 = vrcp.pop %v518
    %v630 = vrcp.pop %v521
    %v631 = vrcp.pop %v524
    %v632 = vmul.f32 %v610, %v628
    %v633 = vmul.f32 %v615, %v629
    %v634 = vmul.f32 %v620, %v630
    %v635 = vmul.f32 %v625, %v631
    %638 = vrot.lane.b32.xlu0 %v378, 8
    %v639 = vpop.permute.xlu0 %638
    %640 = vrot.lane.b32.xlu0 %v379, 8
    %v641 = vpop.permute.xlu0 %640
    %646 = vrot.lane.b32.xlu0 %v632, 16
    %v647 = vpop.permute.xlu0 %646
    %648 = vrot.lane.b32.xlu0 %v633, 16
    %v649 = vpop.permute.xlu0 %648
    %654 = vrot.lane.b32.xlu0 %v634, 24
    %v655 = vpop.permute.xlu0 %654
    %656 = vrot.lane.b32.xlu0 %v635, 24
    %v657 = vpop.permute.xlu0 %656
    %v660 = vsel %vm134, %v376, %v639
    %v661 = vsel %vm134, %v377, %v641
    %v662 = vsel %vm232, %v660, %v647
    %v663 = vsel %vm232, %v661, %v649
    %vm664 = vcmask 195584
    %v665 = vsel %vm664, %v662, %v655
    %v666 = vsel %vm664, %v663, %v657
    %v667 = vld [vmem:[#allocation2] sm:$0xff]
    %v668 = vld [vmem:[#allocation2 + $0x8] sm:$0xff]
    %v669 = vld [vmem:[#allocation2 + $0x10] sm:$0xff]
    %v670 = vld [vmem:[#allocation2 + $0x18] sm:$0xff]
    %v672 = vsel %vm38, %v665, 0
    %v675 = vsel %vm38, %v666, 0
    %677 = vmatprep.subr.mxu0 0.0
    %678 = vmatpush1.msra.mxu0 %v667
    %679 = vmatprep.subr.mxu0 0.0
    %680 = vmatpush1.msra.mxu0 %v668
    %681 = vmatprep.subr.mxu0 0.0
    %682 = vmatpush1.msra.mxu0 %v669
    %683 = vmatprep.subr.mxu0 0.0
    %684 = vmatpush1.msra.mxu0 %v670
    %685 = vmatprep.subr.mxu0 0.0
    %686 = vmatpush1.msra.mxu0 0.0
    %687 = vmatprep.subr.mxu0 0.0
    %688 = vmatpush1.msra.mxu0 0.0
    %689 = vmatprep.subr.mxu0 0.0
    %690 = vmatpush1.msra.mxu0 0.0
    %691 = vmatprep.subr.mxu0 0.0
    %692 = vmatpush1.msra.mxu0 0.0
    %693 = vmatprep.subr.mxu0 0.0
    %694 = vmatpush1.msra.mxu0 0.0
    %695 = vmatprep.subr.mxu0 0.0
    %696 = vmatpush1.msra.mxu0 0.0
    %697 = vmatprep.subr.mxu0 0.0
    %698 = vmatpush1.msra.mxu0 0.0
    %699 = vmatprep.subr.mxu0 0.0
    %700 = vmatpush1.msra.mxu0 0.0
    %701 = vmatprep.subr.mxu0 0.0
    %702 = vmatpush1.msra.mxu0 0.0
    %703 = vmatprep.subr.mxu0 0.0
    %704 = vmatpush1.msra.mxu0 0.0
    %705 = vmatprep.subr.mxu0 0.0
    %706 = vmatpush1.msra.mxu0 0.0
    %707 = vmatprep.subr.mxu0 0.0
    %708 = vmatpush1.msra.mxu0 0.0
    %709 = vmatprep.subr.mxu0 0.0
    %710 = vmatpush1.msra.mxu0 0.0
    %711 = vmatprep.subr.mxu0 0.0
    %712 = vmatpush1.msra.mxu0 0.0
    %713 = vmatprep.subr.mxu0 0.0
    %714 = vmatpush1.msra.mxu0 0.0
    %715 = vmatprep.subr.mxu0 0.0
    %716 = vmatpush1.msra.mxu0 0.0
    %717 = vmatprep.subr.mxu0 0.0
    %718 = vmatpush1.msra.mxu0 0.0
    %719 = vmatprep.subr.mxu0 0.0
    %720 = vmatpush1.msra.mxu0 0.0
    %721 = vmatprep.subr.mxu0 0.0
    %722 = vmatpush1.msra.mxu0 0.0
    %723 = vmatprep.subr.mxu0 0.0
    %724 = vmatpush1.msra.mxu0 0.0
    %725 = vmatprep.subr.mxu0 0.0
    %726 = vmatpush1.msra.mxu0 0.0
    %727 = vmatprep.subr.mxu0 0.0
    %728 = vmatpush1.msra.mxu0 0.0
    %729 = vmatprep.subr.mxu0 0.0
    %730 = vmatpush1.msra.mxu0 0.0
    %731 = vmatprep.subr.mxu0 0.0
    %732 = vmatpush1.msra.mxu0 0.0
    %733 = vmatprep.subr.mxu0 0.0
    %734 = vmatpush1.msra.mxu0 0.0
    %735 = vmatprep.subr.mxu0 0.0
    %736 = vmatpush1.msra.mxu0 0.0
    %737 = vmatprep.subr.mxu0 0.0
    %738 = vmatpush1.msra.mxu0 0.0
    %739 = vmatprep.subr.mxu0 0.0
    %740 = vmatpush1.msra.mxu0 0.0
    %741 = vmatprep.mubr.f32.mxu0 0.0
    %742 = vmatmul.mubr.f32.gmra.mrb[0].mxu0 %v672
    %v743 = vpop.f32.mrb[0].mxu0
    %v744 = vadd.f32 0.0, %v743
    %v745 = vpop.f32.mrb[0].mxu0
    %746 = vmatprep.mubr.f32.mxu0 0.0
    %747 = vmatmul.mubr.f32.gmra.mrb[0].mxu0 %v675
    %v748 = vpop.f32.mrb[0].mxu0
    %v749 = vadd.f32 0.0, %v748
    %v750 = vpop.f32.mrb[0].mxu0
    %751 = vdwg.mxu0
    %752 = vst.msk [vmem:[#allocation5] sm:$0xff] %vm38, %v744
    %753 = vst.msk [vmem:[#allocation5 + $0x8] sm:$0xff] %vm38, %v749
    // Predicated region
    $region22: #{causal_multihead_attention.1} parent=1 // pred_check
      _
    $region23: #{causal_multihead_attention.1} parent=1 // pred_check_branch
      %755 = sbr.rel (0) target = $region25
    $region24: #{causal_multihead_attention.1} parent=1 // pred_region
      %s757 = ssub.s32 256, 256
      %758 = vsyncadd [#allocation4], %s757
      %s759 = sshll.u32 [#allocation5], 4
      %s760 = int_to_ptr.vmem [resolvable:$true] %s759
      %765 = dma.vmem_to_hbm [thread:$0]  %s760, 256, %s4, [#allocation4], 128, 128, 8
    $region25: #{causal_multihead_attention.1} parent=1 // pred_fallthru
      _
    // Predicated region
    $region26: #{causal_multihead_attention.1} parent=1 // pred_check
      _
    $region27: #{causal_multihead_attention.1} parent=1 // pred_check_branch
      %767 = sbr.rel (0) target = $region29
    $region28: #{causal_multihead_attention.1} parent=1 // pred_region
      %768 = dma.done [#allocation4], 256
    $region29: #{causal_multihead_attention.1} parent=1 // pred_fallthru
      _
    %769 = vsyncpa [#allocation3], 1
    %770 = vsyncpa [#allocation4], 1

</llo_original>
